<compile_context>
chip_gen: v7x
topology: tpu7x:2x2x1
jax: 0.10.0
libtpu: 0.0.40
codegen_flags: <defaults>
</compile_context>

<pallas_src>
import jax
import jax.numpy as jnp
from jax.experimental import pallas as pl
from jax.experimental.pallas import tpu as pltpu

N_PAD = 128  # lane-dense output width (real num_classes is sliced outside)


def _round_up(x, m):
    return ((x + m - 1) // m) * m


def _linear_kernel(x_ref, w_ref, b_ref, o_ref):
    # Fused matmul + bias add for one (TB, 128) output slab.
    acc = jnp.dot(x_ref[...], w_ref[...], preferred_element_type=jnp.float32)
    o_ref[...] = (acc + b_ref[...]).astype(o_ref.dtype)


def sup_ce_lenet_forward(x, w, b, *, tb=2048):
    """Pallas implementation of SupCeLeNet.forward.

    Args:
      x: (B, dim_in) float32 activations (dim_in = 320 for 'lenet').
      w: (num_classes, dim_in) float32 weight (PyTorch nn.Linear layout).
      b: (num_classes,) float32 bias.
      tb: max batch-tile rows (2048 is safe on v5e/v6e/v7x VMEM budgets).

    Returns:
      [y] with y of shape (B, num_classes) — list, matching the PyTorch forward.
    """
    B, K = x.shape
    N, Kw = w.shape
    assert K == Kw, (K, Kw)
    dtype = x.dtype

    # Lane-dense padded weight / bias: (K, 128) and (1, 128), zeros beyond N.
    w_t = jnp.zeros((K, N_PAD), dtype).at[:, :N].set(jnp.transpose(w).astype(dtype))
    b_p = jnp.zeros((1, N_PAD), dtype).at[:, :N].set(b.astype(dtype))

    # Batch tile: multiple of 8 sublanes, capped at `tb`; pad B so TB divides it.
    TB = min(tb, _round_up(B, 8))
    B_pad = _round_up(B, TB)
    if B_pad != B:
        x = jnp.pad(x, ((0, B_pad - B), (0, 0)))

    itemsize = jnp.dtype(dtype).itemsize
    cost = pl.CostEstimate(
        flops=2 * B * K * N,
        transcendentals=0,
        bytes_accessed=(B * K + B * N + K * N + N) * itemsize,
    )

    y_pad = pl.pallas_call(
        _linear_kernel,
        out_shape=jax.ShapeDtypeStruct((B_pad, N_PAD), dtype),
        grid_spec=pltpu.PrefetchScalarGridSpec(
            num_scalar_prefetch=0,
            grid=(B_pad // TB,),
            in_specs=[
                pl.BlockSpec((TB, K), lambda i: (i, 0)),      # x: streamed per tile
                pl.BlockSpec((K, N_PAD), lambda i: (0, 0)),   # w_t: VMEM-resident
                pl.BlockSpec((1, N_PAD), lambda i: (0, 0)),   # b:   VMEM-resident
            ],
            out_specs=pl.BlockSpec((TB, N_PAD), lambda i: (i, 0)),
        ),
        compiler_params=pltpu.CompilerParams(
            dimension_semantics=("parallel",),      # megacore sharding on v7x
            vmem_limit_bytes=64 * 1024 * 1024,
        ),
        cost_estimate=cost,
    )(x, w_t, b_p)

    # Slice away batch padding and lane padding outside the kernel.
    return [y_pad[:B, :N]]


if __name__ == "__main__":
    DIM_IN = 320       # model_dict['lenet'] -> 320
    NUM_CLASSES = 10
    BATCH = 8

    key = jax.random.PRNGKey(0)
    kx, kw, kb = jax.random.split(key, 3)

    # Deterministic parameter init (mimics nn.Linear uniform(-1/sqrt(K), 1/sqrt(K))).
    bound = 1.0 / (DIM_IN ** 0.5)
    w = jax.random.uniform(kw, (NUM_CLASSES, DIM_IN), jnp.float32, -bound, bound)
    b = jax.random.uniform(kb, (NUM_CLASSES,), jnp.float32, -bound, bound)
    x = jax.random.normal(kx, (BATCH, DIM_IN), jnp.float32)

    out_list = sup_ce_lenet_forward(x, w, b)
    y = jax.block_until_ready(out_list[0])

    # Correctness check against a plain JAX reference of the PyTorch forward.
    y_ref = x @ w.T + b
    assert y.shape == (BATCH, NUM_CLASSES)
    assert jnp.allclose(y, y_ref, atol=1e-5, rtol=1e-5)

    print("KERNEL_OK")
</pallas_src>

<mosaic_0001>
module attributes {stable_mosaic.version = 11 : i64} {
  func.func @_linear_kernel(%arg0: i32, %arg1: memref<8x320xf32, #tpu.memory_space<vmem>>, %arg2: memref<320x128xf32, #tpu.memory_space<vmem>>, %arg3: memref<1x128xf32, #tpu.memory_space<vmem>>, %arg4: memref<8x128xf32, #tpu.memory_space<vmem>>) attributes {dimension_semantics = [#tpu.dimension_semantics<parallel>], iteration_bounds = array<i64: 1>, scalar_prefetch = 0 : i64, scratch_operands = 0 : i64, tpu.core_type = #tpu.core_type<tc>, window_params = [{transform_indices = @transform_0, window_bounds = array<i64: 8, 320>}, {pipeline_mode = #tpu.pipeline_mode<synchronous>, transform_indices = @transform_1, window_bounds = array<i64: 320, 128>}, {pipeline_mode = #tpu.pipeline_mode<synchronous>, transform_indices = @transform_2, window_bounds = array<i64: 1, 128>}, {transform_indices = @transform_3, window_bounds = array<i64: 8, 128>}]} {
    %c0 = arith.constant 0 : index
    %c0_0 = arith.constant 0 : index
    %0 = vector.load %arg1[%c0, %c0_0] : memref<8x320xf32, #tpu.memory_space<vmem>>, vector<8x320xf32>
    %c0_1 = arith.constant 0 : index
    %c0_2 = arith.constant 0 : index
    %1 = vector.load %arg2[%c0_1, %c0_2] : memref<320x128xf32, #tpu.memory_space<vmem>>, vector<320x128xf32>
    %cst = arith.constant dense<0.000000e+00> : vector<8x128xf32>
    %2 = tpu.matmul %0, %1, %cst {dimension_numbers = #tpu.dot_dimension_numbers<[1], [0], [0], [1], [0, 0, 1, 1], [], []>} : vector<8x320xf32>, vector<320x128xf32>, vector<8x128xf32> -> vector<8x128xf32>
    %c0_3 = arith.constant 0 : index
    %c0_4 = arith.constant 0 : index
    %3 = vector.load %arg3[%c0_3, %c0_4] : memref<1x128xf32, #tpu.memory_space<vmem>>, vector<1x128xf32>
    %4 = vector.broadcast %3 : vector<1x128xf32> to vector<8x128xf32>
    %5 = arith.addf %2, %4 : vector<8x128xf32>
    %c0_5 = arith.constant 0 : index
    %c0_6 = arith.constant 0 : index
    %6 = vector.load %arg4[%c0_5, %c0_6] : memref<8x128xf32, #tpu.memory_space<vmem>>, vector<8x128xf32>
    tpu.vector_store %arg4[%c0_5, %c0_6], %5 {strides = array<i32>} : memref<8x128xf32, #tpu.memory_space<vmem>>, vector<8x128xf32>,
    return
  }
  func.func @transform_0(%arg0: i32) -> (i32, i32) {
    %c0_i32 = arith.constant 0 : i32
    %c0_i32_0 = arith.constant 0 : i32
    return %arg0, %c0_i32 : i32, i32
  }
  func.func @transform_1(%arg0: i32) -> (i32, i32) {
    %c0_i32 = arith.constant 0 : i32
    %c0_i32_0 = arith.constant 0 : i32
    %c0_i32_1 = arith.constant 0 : i32
    return %c0_i32, %c0_i32_0 : i32, i32
  }
  func.func @transform_2(%arg0: i32) -> (i32, i32) {
    %c0_i32 = arith.constant 0 : i32
    %c0_i32_0 = arith.constant 0 : i32
    %c0_i32_1 = arith.constant 0 : i32
    return %c0_i32, %c0_i32_0 : i32, i32
  }
  func.func @transform_3(%arg0: i32) -> (i32, i32) {
    %c0_i32 = arith.constant 0 : i32
    %c0_i32_0 = arith.constant 0 : i32
    return %arg0, %c0_i32 : i32, i32
  }
}

</mosaic_0001>

<llo_original>
// kernel: tpu_custom_call.1
$region0: #{tpu_custom_call.1}
  #allocation0 [shape = 'u32[]', space=smem, size = 0x4, offset = 0x4, fixed_abs, tag = 'smem constant byte address 0x4 - core index']
  #allocation1 [shape = 'u32[144,128]{1,0:T(1,128)}', space=vmem, size = 0x12000, scoped, tag = 'internal scratch']
  %s0 = inlined_call_operand.hbm [shape: f32[8,320], index: 0, kind: input, shape index: {}]
  %s1 = inlined_call_operand.hbm [shape: f32[320,128], index: 1, kind: input, shape index: {}]
  %s2 = inlined_call_operand.hbm [shape: f32[1,128], index: 2, kind: input, shape index: {}]
  %s3 = inlined_call_operand.hbm [shape: f32[8,128], index: 3, kind: output, shape index: {}]
  %s4 = sld [smem:[#allocation0]]
  $region34: #{tpu_custom_call.1} parent=0
    _
  %s6 = ssub.s32 1, %s4
  %s7 = scalar_select 0, %s6, %s4
  $region1: #{tpu_custom_call.1} parent=0
    #allocation2 [shape = 'u8[12288]{0}', space=vmem, size = 0x3000, scoped, tag = 'input window, operand 0, single buffered']
    #allocation3 [shape = 's32[1]{0}', space=sflag, size = 0x4, scoped, tag = 'scoped memory for tpu_custom_call.1']
    #allocation4 [shape = 's32[1]{0}', space=sflag, size = 0x4, scoped, tag = 'scoped memory for tpu_custom_call.1']
    #allocation5 [shape = 'u8[163840]{0}', space=vmem, size = 0x28000, scoped, tag = 'input window, operand 1, single buffered']
    #allocation6 [shape = 's32[1]{0}', space=sflag, size = 0x4, scoped, tag = 'scoped memory for tpu_custom_call.1']
    #allocation7 [shape = 'u8[512]{0}', space=vmem, size = 0x400, scoped, tag = 'input window, operand 2, single buffered']
    #allocation8 [shape = 'u8[4096]{0}', space=vmem, size = 0x1000, scoped, tag = 'output window, operand 0, single buffered']
    %8 = vsyncpa [#allocation3], 0
    %9 = vsyncpa [#allocation6], 0
    %10 = vsyncpa [#allocation4], 0
    // Predicated region
    $region2: #{tpu_custom_call.1} parent=1 // pred_check
      _
    $region3: #{tpu_custom_call.1} parent=1 // pred_check_branch
      %12 = sbr.rel (0) target = $region5
    $region4: #{tpu_custom_call.1} parent=1 // pred_region
      %s14 = ssub.s32 384, 384
      %15 = vsyncadd [#allocation3], %s14
      %s17 = sshll.u32 [#allocation2], 4
      %s18 = int_to_ptr.vmem [resolvable:$true] %s17
      %20 = dma.hbm_to_vmem [thread:$0]  %s0, 384, %s18, [#allocation3]
    $region5: #{tpu_custom_call.1} parent=1 // pred_fallthru
      _
    // Predicated region
    $region6: #{tpu_custom_call.1} parent=1 // pred_check
      _
    $region7: #{tpu_custom_call.1} parent=1 // pred_check_branch
      %22 = sbr.rel (0) target = $region9
    $region8: #{tpu_custom_call.1} parent=1 // pred_region
      %s24 = ssub.s32 5120, 5120
      %25 = vsyncadd [#allocation6], %s24
      %s26 = sshll.u32 [#allocation5], 4
      %s27 = int_to_ptr.vmem [resolvable:$true] %s26
      %32 = dma.hbm_to_vmem [thread:$0]  %s1, 5120, %s27, [#allocation6], 128, 128, 8
    $region9: #{tpu_custom_call.1} parent=1 // pred_fallthru
      _
    // Predicated region
    $region10: #{tpu_custom_call.1} parent=1 // pred_check
      _
    $region11: #{tpu_custom_call.1} parent=1 // pred_check_branch
      %34 = sbr.rel (0) target = $region13
    $region12: #{tpu_custom_call.1} parent=1 // pred_region
      %s36 = ssub.s32 16, 16
      %37 = vsyncadd [#allocation6], %s36
      %s39 = sshll.u32 [#allocation7], 4
      %s40 = int_to_ptr.vmem [resolvable:$true] %s39
      %42 = dma.hbm_to_vmem [thread:$0]  %s2, 16, %s40, [#allocation6]
    $region13: #{tpu_custom_call.1} parent=1 // pred_fallthru
      _
    // Predicated region
    $region14: #{tpu_custom_call.1} parent=1 // pred_check
      _
    $region15: #{tpu_custom_call.1} parent=1 // pred_check_branch
      %44 = sbr.rel (0) target = $region17
    $region16: #{tpu_custom_call.1} parent=1 // pred_region
      %45 = dma.done [#allocation3], 384
    $region17: #{tpu_custom_call.1} parent=1 // pred_fallthru
      _
    // Predicated region
    $region18: #{tpu_custom_call.1} parent=1 // pred_check
      _
    $region19: #{tpu_custom_call.1} parent=1 // pred_check_branch
      %47 = sbr.rel (0) target = $region21
    $region20: #{tpu_custom_call.1} parent=1 // pred_region
      %48 = dma.done [#allocation6], 5120
    $region21: #{tpu_custom_call.1} parent=1 // pred_fallthru
      _
    // Predicated region
    $region22: #{tpu_custom_call.1} parent=1 // pred_check
      _
    $region23: #{tpu_custom_call.1} parent=1 // pred_check_branch
      %50 = sbr.rel (0) target = $region25
    $region24: #{tpu_custom_call.1} parent=1 // pred_region
      %51 = dma.done [#allocation6], 16
    $region25: #{tpu_custom_call.1} parent=1 // pred_fallthru
      _
    %v52 = vld [vmem:[#allocation2] sm:$0xff]
    %v53 = vld [vmem:[#allocation2 + $0x8] sm:$0xff]
    %v54 = vld [vmem:[#allocation2 + $0x10] sm:$0xff]
    %v55 = vld [vmem:[#allocation5] sm:$0xff]
    %v56 = vld [vmem:[#allocation5 + $0x8] sm:$0xff]
    %v57 = vld [vmem:[#allocation5 + $0x10] sm:$0xff]
    %v58 = vld [vmem:[#allocation5 + $0x18] sm:$0xff]
    %v59 = vld [vmem:[#allocation5 + $0x20] sm:$0xff]
    %v60 = vld [vmem:[#allocation5 + $0x28] sm:$0xff]
    %v61 = vld [vmem:[#allocation5 + $0x30] sm:$0xff]
    %v62 = vld [vmem:[#allocation5 + $0x38] sm:$0xff]
    %v63 = vld [vmem:[#allocation5 + $0x40] sm:$0xff]
    %v64 = vld [vmem:[#allocation5 + $0x48] sm:$0xff]
    %v65 = vld [vmem:[#allocation5 + $0x50] sm:$0xff]
    %v66 = vld [vmem:[#allocation5 + $0x58] sm:$0xff]
    %v67 = vld [vmem:[#allocation5 + $0x60] sm:$0xff]
    %v68 = vld [vmem:[#allocation5 + $0x68] sm:$0xff]
    %v69 = vld [vmem:[#allocation5 + $0x70] sm:$0xff]
    %v70 = vld [vmem:[#allocation5 + $0x78] sm:$0xff]
    %v71 = vld [vmem:[#allocation5 + $0x80] sm:$0xff]
    %v72 = vld [vmem:[#allocation5 + $0x88] sm:$0xff]
    %v73 = vld [vmem:[#allocation5 + $0x90] sm:$0xff]
    %v74 = vld [vmem:[#allocation5 + $0x98] sm:$0xff]
    %v75 = vld [vmem:[#allocation5 + $0xa0] sm:$0xff]
    %v76 = vld [vmem:[#allocation5 + $0xa8] sm:$0xff]
    %v77 = vld [vmem:[#allocation5 + $0xb0] sm:$0xff]
    %v78 = vld [vmem:[#allocation5 + $0xb8] sm:$0xff]
    %v79 = vld [vmem:[#allocation5 + $0xc0] sm:$0xff]
    %v80 = vld [vmem:[#allocation5 + $0xc8] sm:$0xff]
    %v81 = vld [vmem:[#allocation5 + $0xd0] sm:$0xff]
    %v82 = vld [vmem:[#allocation5 + $0xd8] sm:$0xff]
    %v83 = vld [vmem:[#allocation5 + $0xe0] sm:$0xff]
    %v84 = vld [vmem:[#allocation5 + $0xe8] sm:$0xff]
    %v85 = vld [vmem:[#allocation5 + $0xf0] sm:$0xff]
    %v86 = vld [vmem:[#allocation5 + $0xf8] sm:$0xff]
    %v87 = vld [vmem:[#allocation5 + $0x100] sm:$0xff]
    %v88 = vld [vmem:[#allocation5 + $0x108] sm:$0xff]
    %v89 = vld [vmem:[#allocation5 + $0x110] sm:$0xff]
    %v90 = vld [vmem:[#allocation5 + $0x118] sm:$0xff]
    %v91 = vld [vmem:[#allocation5 + $0x120] sm:$0xff]
    %v92 = vld [vmem:[#allocation5 + $0x128] sm:$0xff]
    %v93 = vld [vmem:[#allocation5 + $0x130] sm:$0xff]
    %v94 = vld [vmem:[#allocation5 + $0x138] sm:$0xff]
    %v95 = vld [vmem:[#allocation7] sm:$0x1]
    %v97 = vlaneseq
    %v98 = vshrl.u32 %v97, 7
    %v99 = vsub.s32 0, %v98
    %v100 = vrot.slane %v95, %v99
    %vm102 = vcmask 523264
    %v104 = vsel %vm102, %v54, 0
    %106 = vmatprep.subr.mxu0 0.0
    %107 = vmatpush1.msra.mxu0 %v55
    %108 = vmatprep.subr.mxu0 0.0
    %109 = vmatpush1.msra.mxu0 %v56
    %110 = vmatprep.subr.mxu0 0.0
    %111 = vmatpush1.msra.mxu0 %v57
    %112 = vmatprep.subr.mxu0 0.0
    %113 = vmatpush1.msra.mxu0 %v58
    %114 = vmatprep.subr.mxu0 0.0
    %115 = vmatpush1.msra.mxu0 %v59
    %116 = vmatprep.subr.mxu0 0.0
    %117 = vmatpush1.msra.mxu0 %v60
    %118 = vmatprep.subr.mxu0 0.0
    %119 = vmatpush1.msra.mxu0 %v61
    %120 = vmatprep.subr.mxu0 0.0
    %121 = vmatpush1.msra.mxu0 %v62
    %122 = vmatprep.subr.mxu0 0.0
    %123 = vmatpush1.msra.mxu0 %v63
    %124 = vmatprep.subr.mxu0 0.0
    %125 = vmatpush1.msra.mxu0 %v64
    %126 = vmatprep.subr.mxu0 0.0
    %127 = vmatpush1.msra.mxu0 %v65
    %128 = vmatprep.subr.mxu0 0.0
    %129 = vmatpush1.msra.mxu0 %v66
    %130 = vmatprep.subr.mxu0 0.0
    %131 = vmatpush1.msra.mxu0 %v67
    %132 = vmatprep.subr.mxu0 0.0
    %133 = vmatpush1.msra.mxu0 %v68
    %134 = vmatprep.subr.mxu0 0.0
    %135 = vmatpush1.msra.mxu0 %v69
    %136 = vmatprep.subr.mxu0 0.0
    %137 = vmatpush1.msra.mxu0 %v70
    %138 = vmatprep.subr.mxu0 0.0
    %139 = vmatpush1.msra.mxu0 %v71
    %140 = vmatprep.subr.mxu0 0.0
    %141 = vmatpush1.msra.mxu0 %v72
    %142 = vmatprep.subr.mxu0 0.0
    %143 = vmatpush1.msra.mxu0 %v73
    %144 = vmatprep.subr.mxu0 0.0
    %145 = vmatpush1.msra.mxu0 %v74
    %146 = vmatprep.subr.mxu0 0.0
    %147 = vmatpush1.msra.mxu0 %v75
    %148 = vmatprep.subr.mxu0 0.0
    %149 = vmatpush1.msra.mxu0 %v76
    %150 = vmatprep.subr.mxu0 0.0
    %151 = vmatpush1.msra.mxu0 %v77
    %152 = vmatprep.subr.mxu0 0.0
    %153 = vmatpush1.msra.mxu0 %v78
    %154 = vmatprep.subr.mxu0 0.0
    %155 = vmatpush1.msra.mxu0 %v79
    %156 = vmatprep.subr.mxu0 0.0
    %157 = vmatpush1.msra.mxu0 %v80
    %158 = vmatprep.subr.mxu0 0.0
    %159 = vmatpush1.msra.mxu0 %v81
    %160 = vmatprep.subr.mxu0 0.0
    %161 = vmatpush1.msra.mxu0 %v82
    %162 = vmatprep.subr.mxu0 0.0
    %163 = vmatpush1.msra.mxu0 %v83
    %164 = vmatprep.subr.mxu0 0.0
    %165 = vmatpush1.msra.mxu0 %v84
    %166 = vmatprep.subr.mxu0 0.0
    %167 = vmatpush1.msra.mxu0 %v85
    %168 = vmatprep.subr.mxu0 0.0
    %169 = vmatpush1.msra.mxu0 %v86
    %170 = vmatprep.mubr.f32.mxu0 %v53
    %171 = vmatmul.mubr.f32.gmra.mrb[0].mxu0 %v52
    %v172 = vpop.f32.mrb[0].mxu0
    %v173 = vadd.f32 %v100, %v172
    %v174 = vpop.f32.mrb[0].mxu0
    %175 = vdwg.mxu0
    %176 = vmatprep.subr.mxu0 0.0
    %177 = vmatpush1.msra.mxu0 %v87
    %178 = vmatprep.subr.mxu0 0.0
    %179 = vmatpush1.msra.mxu0 %v88
    %180 = vmatprep.subr.mxu0 0.0
    %181 = vmatpush1.msra.mxu0 %v89
    %182 = vmatprep.subr.mxu0 0.0
    %183 = vmatpush1.msra.mxu0 %v90
    %184 = vmatprep.subr.mxu0 0.0
    %185 = vmatpush1.msra.mxu0 %v91
    %186 = vmatprep.subr.mxu0 0.0
    %187 = vmatpush1.msra.mxu0 %v92
    %188 = vmatprep.subr.mxu0 0.0
    %189 = vmatpush1.msra.mxu0 %v93
    %190 = vmatprep.subr.mxu0 0.0
    %191 = vmatpush1.msra.mxu0 %v94
    %192 = vmatprep.subr.mxu0 0.0
    %193 = vmatpush1.msra.mxu0 0.0
    %194 = vmatprep.subr.mxu0 0.0
    %195 = vmatpush1.msra.mxu0 0.0
    %196 = vmatprep.subr.mxu0 0.0
    %197 = vmatpush1.msra.mxu0 0.0
    %198 = vmatprep.subr.mxu0 0.0
    %199 = vmatpush1.msra.mxu0 0.0
    %200 = vmatprep.subr.mxu0 0.0
    %201 = vmatpush1.msra.mxu0 0.0
    %202 = vmatprep.subr.mxu0 0.0
    %203 = vmatpush1.msra.mxu0 0.0
    %204 = vmatprep.subr.mxu0 0.0
    %205 = vmatpush1.msra.mxu0 0.0
    %206 = vmatprep.subr.mxu0 0.0
    %207 = vmatpush1.msra.mxu0 0.0
    %208 = vmatprep.subr.mxu0 0.0
    %209 = vmatpush1.msra.mxu0 0.0
    %210 = vmatprep.subr.mxu0 0.0
    %211 = vmatpush1.msra.mxu0 0.0
    %212 = vmatprep.subr.mxu0 0.0
    %213 = vmatpush1.msra.mxu0 0.0
    %214 = vmatprep.subr.mxu0 0.0
    %215 = vmatpush1.msra.mxu0 0.0
    %216 = vmatprep.subr.mxu0 0.0
    %217 = vmatpush1.msra.mxu0 0.0
    %218 = vmatprep.subr.mxu0 0.0
    %219 = vmatpush1.msra.mxu0 0.0
    %220 = vmatprep.subr.mxu0 0.0
    %221 = vmatpush1.msra.mxu0 0.0
    %222 = vmatprep.subr.mxu0 0.0
    %223 = vmatpush1.msra.mxu0 0.0
    %224 = vmatprep.subr.mxu0 0.0
    %225 = vmatpush1.msra.mxu0 0.0
    %226 = vmatprep.subr.mxu0 0.0
    %227 = vmatpush1.msra.mxu0 0.0
    %228 = vmatprep.subr.mxu0 0.0
    %229 = vmatpush1.msra.mxu0 0.0
    %230 = vmatprep.subr.mxu0 0.0
    %231 = vmatpush1.msra.mxu0 0.0
    %232 = vmatprep.subr.mxu0 0.0
    %233 = vmatpush1.msra.mxu0 0.0
    %234 = vmatprep.subr.mxu0 0.0
    %235 = vmatpush1.msra.mxu0 0.0
    %236 = vmatprep.subr.mxu0 0.0
    %237 = vmatpush1.msra.mxu0 0.0
    %238 = vmatprep.subr.mxu0 0.0
    %239 = vmatpush1.msra.mxu0 0.0
    %240 = vmatprep.mubr.f32.mxu0 0.0
    %241 = vmatmul.mubr.f32.gmra.mrb[0].mxu0 %v104
    %v242 = vpop.f32.mrb[0].mxu0
    %v243 = vadd.f32 %v173, %v242
    %v244 = vpop.f32.mrb[0].mxu0
    %245 = vdwg.mxu0
    %246 = vst [vmem:[#allocation8] sm:$0xff] %v243
    // Predicated region
    $region26: #{tpu_custom_call.1} parent=1 // pred_check
      _
    $region27: #{tpu_custom_call.1} parent=1 // pred_check_branch
      %248 = sbr.rel (0) target = $region29
    $region28: #{tpu_custom_call.1} parent=1 // pred_region
      %s250 = ssub.s32 128, 128
      %251 = vsyncadd [#allocation4], %s250
      %s253 = sshll.u32 [#allocation8], 4
      %s254 = int_to_ptr.vmem [resolvable:$true] %s253
      %256 = dma.vmem_to_hbm [thread:$0]  %s254, 128, %s3, [#allocation4]
    $region29: #{tpu_custom_call.1} parent=1 // pred_fallthru
      _
    // Predicated region
    $region30: #{tpu_custom_call.1} parent=1 // pred_check
      _
    $region31: #{tpu_custom_call.1} parent=1 // pred_check_branch
      %258 = sbr.rel (0) target = $region33
    $region32: #{tpu_custom_call.1} parent=1 // pred_region
      %259 = dma.done [#allocation4], 128
    $region33: #{tpu_custom_call.1} parent=1 // pred_fallthru
      _
    %260 = vsyncpa [#allocation3], 1
    %261 = vsyncpa [#allocation6], 1
    %262 = vsyncpa [#allocation4], 1

</llo_original>
